<compile_context>
chip_gen: v6e
topology: v6e:2x2x1
jax: 0.10.0
libtpu: 0.0.40
codegen_flags: <defaults>
</compile_context>

<pallas_src>
import functools
from math import sqrt

import jax
import jax.numpy as jnp
from jax.experimental import pallas as pl
from jax.experimental.pallas import tpu as pltpu


_LANE = 128
_SUBLANE = 8
# Conservative double-buffered tile budget (bytes): fits v5e's 16 MiB scoped-VMEM
# default and is far under v7x's 32 MiB scoped / 64 MiB physical VMEM.
_TILE_BUDGET_BYTES = 12 * 1024 * 1024
_VMEM_LIMIT_BYTES = 32 * 1024 * 1024
_TM_DEFAULT = 256
_TN_DEFAULT = 512


def _round_up(x, m):
    return ((x + m - 1) // m) * m


# ----------------------------- kernels -----------------------------

def _single_k_kernel(x_ref, w_ref, b_ref, o_ref, *, scale):
    # One MXU pass over the whole (padded) K: no K grid axis, no accumulator.
    acc = jnp.dot(x_ref[...], w_ref[...], preferred_element_type=jnp.float32)
    o_ref[...] = (acc * scale + b_ref[...]).astype(o_ref.dtype)


def _multi_k_f32out_kernel(x_ref, w_ref, b_ref, o_ref, *, scale):
    # f32 output: accumulate straight into the K-resident output block.
    k = pl.program_id(2)

    @pl.when(k == 0)
    def _():
        o_ref[...] = jnp.zeros_like(o_ref)

    o_ref[...] += jnp.dot(x_ref[...], w_ref[...],
                          preferred_element_type=jnp.float32)

    @pl.when(k == pl.num_programs(2) - 1)
    def _():
        o_ref[...] = o_ref[...] * scale + b_ref[...]


def _multi_k_acc_kernel(x_ref, w_ref, b_ref, o_ref, acc_ref, *, scale):
    # Narrow output dtype: accumulate in an f32 VMEM scratch, cast once.
    k = pl.program_id(2)

    @pl.when(k == 0)
    def _():
        acc_ref[...] = jnp.zeros_like(acc_ref)

    acc_ref[...] += jnp.dot(x_ref[...], w_ref[...],
                            preferred_element_type=jnp.float32)

    @pl.when(k == pl.num_programs(2) - 1)
    def _():
        o_ref[...] = (acc_ref[...] * scale + b_ref[...]).astype(o_ref.dtype)


# ----------------------------- wrapper -----------------------------

def make_equal_linear(weight_orig, bias, *, compute_dtype=jnp.bfloat16,
                      tm=None, tn=None, tk=None, out_dtype=None):
    """Build an EqualLinear forward fn.

    The weight transpose / zero-pad / dtype cast is done ONCE here (hoisted out of
    the forward path), mirroring the module's parameter-init-time cost.
    """
    out_dim, in_dim = weight_orig.shape
    scale = float(sqrt(2.0 / in_dim))  # fan_in = in_dim * 1 (EqualLR.compute_weight)
    esz = jnp.dtype(compute_dtype).itemsize

    # ---- N tiling ----
    Np0 = _round_up(out_dim, _LANE)
    if tn is None:
        tn_ = min(_TN_DEFAULT, Np0)
        while Np0 % tn_ != 0:          # keep Np == Np0 (no extra N padding)
            tn_ -= _LANE
        # v7x has 2 TensorCores: when a small batch gives a single M tile, make
        # sure the N axis still yields >= 2 "parallel" tiles if out_dim allows it.
        if Np0 // tn_ < 2 and Np0 >= 2 * _LANE:
            half = (Np0 // 2) // _LANE * _LANE
            if half >= _LANE and Np0 % half == 0:
                tn_ = half
    else:
        tn_ = min(_round_up(tn, _LANE), Np0)
    Np = _round_up(out_dim, tn_)

    # ---- K tiling: prefer a single full-K pass when it fits the VMEM budget ----
    Kp0 = _round_up(in_dim, _LANE)
    out_bytes = 4  # budget with f32 output tiles (worst case)
    fixed = 2 * _TM_DEFAULT * tn_ * out_bytes + 2 * tn_ * 4 + _TM_DEFAULT * tn_ * 4
    per_k = 2 * (_TM_DEFAULT + tn_) * esz
    tk_max = max(_LANE, (_TILE_BUDGET_BYTES - fixed) // per_k // _LANE * _LANE)
    if tk is None:
        if Kp0 <= tk_max:
            tk_ = Kp0                  # single-K fast path
        else:
            tk_ = tk_max
            while Kp0 % tk_ != 0:
                tk_ -= _LANE
    else:
        tk_ = min(_round_up(tk, _LANE), Kp0)
    Kp = _round_up(in_dim, tk_)

    # ---- one-time parameter prep (hoisted out of the forward path) ----
    w_t = jnp.pad(weight_orig.T, ((0, Kp - in_dim), (0, Np - out_dim)))
    w_t = w_t.astype(compute_dtype)                                 # (Kp, Np)
    b_p = jnp.pad(bias.astype(jnp.float32), (0, Np - out_dim)).reshape(1, Np)
    # TODO(synk): optional int8 weight path (per-channel scale folded into the
    # epilogue) for v5e/v6e inference; v7x dropped the integer MXU so skip there.

    tm_req = _TM_DEFAULT if tm is None else max(_SUBLANE, _round_up(tm, _SUBLANE))

    def forward(x):
        B, K = x.shape
        assert K == in_dim, f"expected in_dim={in_dim}, got {K}"
        odt = x.dtype if out_dtype is None else out_dtype

        tm_ = min(tm_req, _round_up(B, _SUBLANE))
        Mp = _round_up(B, tm_)
        # Zero-padding is exact: padded K rows contribute 0; padded M/N sliced off.
        x_p = jnp.pad(x, ((0, Mp - B), (0, Kp - K))).astype(compute_dtype)

        n_k = Kp // tk_
        cost = pl.CostEstimate(
            flops=2 * Mp * Np * Kp,
            transcendentals=0,
            bytes_accessed=(Mp * Kp + Kp * Np) * esz + Np * 4
                           + Mp * Np * jnp.dtype(odt).itemsize,
        )

        if n_k == 1:
            grid = (Mp // tm_, Np // tn_)
            kernel = functools.partial(_single_k_kernel, scale=scale)
            in_specs = [
                pl.BlockSpec((tm_, Kp), lambda i, j: (i, 0)),    # x tile (full K)
                pl.BlockSpec((Kp, tn_), lambda i, j: (0, j)),    # weight tile
                pl.BlockSpec((1, tn_), lambda i, j: (0, j)),     # bias tile
            ]
            out_spec = pl.BlockSpec((tm_, tn_), lambda i, j: (i, j))
            scratch = []
            dims = ("parallel", "parallel")
        else:
            grid = (Mp // tm_, Np // tn_, n_k)
            in_specs = [
                pl.BlockSpec((tm_, tk_), lambda i, j, k: (i, k)),
                pl.BlockSpec((tk_, tn_), lambda i, j, k: (k, j)),
                pl.BlockSpec((1, tn_), lambda i, j, k: (0, j)),
            ]
            out_spec = pl.BlockSpec((tm_, tn_), lambda i, j, k: (i, j))
            dims = ("parallel", "parallel", "arbitrary")
            if jnp.dtype(odt) == jnp.dtype(jnp.float32):
                kernel = functools.partial(_multi_k_f32out_kernel, scale=scale)
                scratch = []                      # accumulate directly into o_ref
            else:
                kernel = functools.partial(_multi_k_acc_kernel, scale=scale)
                scratch = [pltpu.VMEM((tm_, tn_), jnp.float32)]

        out_p = pl.pallas_call(
            kernel,
            out_shape=jax.ShapeDtypeStruct((Mp, Np), odt),
            grid_spec=pltpu.PrefetchScalarGridSpec(
                num_scalar_prefetch=0,
                grid=grid,
                in_specs=in_specs,
                out_specs=out_spec,
                scratch_shapes=scratch,
            ),
            compiler_params=pltpu.CompilerParams(
                dimension_semantics=dims,
                vmem_limit_bytes=_VMEM_LIMIT_BYTES),
            cost_estimate=cost,
        )(x_p, w_t, b_p)

        return out_p[:B, :out_dim]

    return forward


def equal_linear(x, weight_orig, bias, **kwargs):
    """One-shot convenience wrapper (parameter prep not hoisted)."""
    return make_equal_linear(weight_orig, bias, **kwargs)(x)


if __name__ == "__main__":
    key = jax.random.PRNGKey(0)
    k_x1, k_w1, k_x2, k_w2 = jax.random.split(key, 4)

    # --- Check 1: small module-consistent shapes ---
    B1, in1, out1 = 8, 32, 32
    w1 = jax.random.normal(k_w1, (out1, in1), dtype=jnp.float32)  # weight.data.normal_()
    b1 = jnp.zeros((out1,), dtype=jnp.float32)                    # bias.data.zero_()
    x1 = jax.random.normal(k_x1, (B1, in1), dtype=jnp.float32)
    s1 = sqrt(2.0 / in1)

    # (a) default fast path: bf16 operands, f32 accumulate, single-K grid.
    fwd1 = make_equal_linear(w1, b1)
    o1a = jax.block_until_ready(fwd1(x1))
    ref1a = (x1.astype(jnp.bfloat16).astype(jnp.float32)
             @ w1.astype(jnp.bfloat16).astype(jnp.float32).T) * s1 + b1
    assert o1a.shape == (B1, out1) and o1a.dtype == x1.dtype
    assert jnp.allclose(o1a, ref1a, atol=1e-3, rtol=1e-3)

    # (b) exact-f32 compute path vs the PyTorch-semantics reference.
    fwd1_f32 = make_equal_linear(w1, b1, compute_dtype=jnp.float32)
    o1b = jax.block_until_ready(fwd1_f32(x1))
    ref1b = x1 @ (w1 * s1).T + b1
    assert jnp.allclose(o1b, ref1b, atol=1e-5, rtol=1e-5)

    # --- Check 2: non-aligned shapes, forced K tiling (multi-K, f32 direct accumulate) ---
    B2, in2, out2 = 40, 640, 384
    w2 = jax.random.normal(k_w2, (out2, in2), dtype=jnp.float32)
    b2 = jnp.zeros((out2,), dtype=jnp.float32)
    x2 = jax.random.normal(k_x2, (B2, in2), dtype=jnp.float32)
    s2 = sqrt(2.0 / in2)

    fwd2 = make_equal_linear(w2, b2, compute_dtype=jnp.float32, tm=32, tn=128, tk=256)
    o2 = jax.block_until_ready(fwd2(x2))
    ref2 = x2 @ (w2 * s2).T + b2
    assert jnp.allclose(o2, ref2, atol=1e-4, rtol=1e-4)

    # --- Check 3: bf16 output + multi-K -> f32 scratch-accumulator path ---
    x3 = x2.astype(jnp.bfloat16)
    fwd3 = make_equal_linear(w2, b2, tm=32, tn=128, tk=256)       # bf16 compute
    o3 = jax.block_until_ready(fwd3(x3))
    ref3 = (x3.astype(jnp.float32)
            @ w2.astype(jnp.bfloat16).astype(jnp.float32).T) * s2 + b2
    assert o3.dtype == jnp.bfloat16
    assert jnp.allclose(o3.astype(jnp.float32), ref3, atol=2e-2, rtol=2e-2)

    print("KERNEL_OK")
</pallas_src>

<mosaic_0001>
module attributes {stable_mosaic.version = 11 : i64} {
  func.func @_single_k_kernel(%arg0: i32, %arg1: i32, %arg2: memref<8x128xbf16, #tpu.memory_space<vmem>>, %arg3: memref<128x128xbf16, #tpu.memory_space<vmem>>, %arg4: memref<1x128xf32, #tpu.memory_space<vmem>>, %arg5: memref<8x128xf32, #tpu.memory_space<vmem>>) attributes {dimension_semantics = [#tpu.dimension_semantics<parallel>, #tpu.dimension_semantics<parallel>], iteration_bounds = array<i64: 1, 1>, scalar_prefetch = 0 : i64, scratch_operands = 0 : i64, tpu.core_type = #tpu.core_type<tc>, window_params = [{transform_indices = @transform_0, window_bounds = array<i64: 8, 128>}, {transform_indices = @transform_1, window_bounds = array<i64: 128, 128>}, {transform_indices = @transform_2, window_bounds = array<i64: 1, 128>}, {transform_indices = @transform_3, window_bounds = array<i64: 8, 128>}]} {
    %c0 = arith.constant 0 : index
    %c0_0 = arith.constant 0 : index
    %0 = vector.load %arg2[%c0, %c0_0] : memref<8x128xbf16, #tpu.memory_space<vmem>>, vector<8x128xbf16>
    %c0_1 = arith.constant 0 : index
    %c0_2 = arith.constant 0 : index
    %1 = vector.load %arg3[%c0_1, %c0_2] : memref<128x128xbf16, #tpu.memory_space<vmem>>, vector<128x128xbf16>
    %cst = arith.constant dense<0.000000e+00> : vector<8x128xf32>
    %2 = tpu.matmul %0, %1, %cst {dimension_numbers = #tpu.dot_dimension_numbers<[1], [0], [0], [1], [0, 0, 1, 1], [], []>} : vector<8x128xbf16>, vector<128x128xbf16>, vector<8x128xf32> -> vector<8x128xf32>
    %cst_3 = arith.constant 2.500000e-01 : f32
    %3 = vector.broadcast %cst_3 : f32 to vector<8x128xf32>
    %4 = arith.mulf %2, %3 : vector<8x128xf32>
    %c0_4 = arith.constant 0 : index
    %c0_5 = arith.constant 0 : index
    %5 = vector.load %arg4[%c0_4, %c0_5] : memref<1x128xf32, #tpu.memory_space<vmem>>, vector<1x128xf32>
    %6 = vector.broadcast %5 : vector<1x128xf32> to vector<8x128xf32>
    %7 = arith.addf %4, %6 : vector<8x128xf32>
    %c0_6 = arith.constant 0 : index
    %c0_7 = arith.constant 0 : index
    %8 = vector.load %arg5[%c0_6, %c0_7] : memref<8x128xf32, #tpu.memory_space<vmem>>, vector<8x128xf32>
    tpu.vector_store %arg5[%c0_6, %c0_7], %7 {strides = array<i32>} : memref<8x128xf32, #tpu.memory_space<vmem>>, vector<8x128xf32>,
    return
  }
  func.func @transform_0(%arg0: i32, %arg1: i32) -> (i32, i32) {
    %c0_i32 = arith.constant 0 : i32
    %c0_i32_0 = arith.constant 0 : i32
    return %arg0, %c0_i32 : i32, i32
  }
  func.func @transform_1(%arg0: i32, %arg1: i32) -> (i32, i32) {
    %c0_i32 = arith.constant 0 : i32
    %c0_i32_0 = arith.constant 0 : i32
    return %c0_i32, %arg1 : i32, i32
  }
  func.func @transform_2(%arg0: i32, %arg1: i32) -> (i32, i32) {
    %c0_i32 = arith.constant 0 : i32
    %c0_i32_0 = arith.constant 0 : i32
    return %c0_i32, %arg1 : i32, i32
  }
  func.func @transform_3(%arg0: i32, %arg1: i32) -> (i32, i32) {
    %c0_i32 = arith.constant 0 : i32
    return %arg0, %arg1 : i32, i32
  }
}

</mosaic_0001>

<llo_original>
// kernel: tpu_custom_call.1
$region0: #{tpu_custom_call.1}
  #allocation0 [shape = 'u32[]', space=smem, size = 0x4, offset = 0x4, fixed_abs, tag = 'smem constant byte address 0x4 - core index']
  #allocation1 [shape = 'u32[144,128]{1,0:T(1,128)}', space=vmem, size = 0x12000, scoped, tag = 'internal scratch']
  %s0 = inlined_call_operand.hbm [shape: bf16[8,128], index: 0, kind: input, shape index: {}]
  %s1 = inlined_call_operand.hbm [shape: bf16[128,128], index: 1, kind: input, shape index: {}]
  %s2 = inlined_call_operand.vmem [shape: f32[1,128], index: 2, kind: input, shape index: {}]
  %s3 = inlined_call_operand.hbm [shape: f32[8,128], index: 3, kind: output, shape index: {}]
  %s4 = sld [smem:[#allocation0]]
  $region30: #{tpu_custom_call.1} parent=0
    _
  %s6 = ssub.s32 1, %s4
  %s7 = scalar_select 0, %s6, %s4
  $region1: #{tpu_custom_call.1} parent=0
    #allocation2 [shape = 'u8[2048]{0}', space=vmem, size = 0x800, scoped, tag = 'input window, operand 0, single buffered']
    #allocation3 [shape = 's32[1]{0}', space=sflag, size = 0x4, scoped, tag = 'scoped memory for tpu_custom_call.1']
    #allocation4 [shape = 's32[1]{0}', space=sflag, size = 0x4, scoped, tag = 'scoped memory for tpu_custom_call.1']
    #allocation5 [shape = 'u8[32768]{0}', space=vmem, size = 0x8000, scoped, tag = 'input window, operand 1, single buffered']
    #allocation6 [shape = 's32[1]{0}', space=sflag, size = 0x4, scoped, tag = 'scoped memory for tpu_custom_call.1']
    #allocation7 [shape = 'u8[4096]{0}', space=vmem, size = 0x1000, scoped, tag = 'output window, operand 0, single buffered']
    %8 = vsyncpa [#allocation3], 0
    %9 = vsyncpa [#allocation6], 0
    %10 = vsyncpa [#allocation4], 0
    // Predicated region
    $region2: #{tpu_custom_call.1} parent=1 // pred_check
      _
    $region3: #{tpu_custom_call.1} parent=1 // pred_check_branch
      %12 = sbr.rel (0) target = $region5
    $region4: #{tpu_custom_call.1} parent=1 // pred_region
      %s14 = ssub.s32 64, 64
      %15 = vsyncadd [#allocation3], %s14
      %s17 = sshll.u32 [#allocation2], 4
      %s18 = int_to_ptr.vmem [resolvable:$true] %s17
      %20 = dma.hbm_to_vmem [thread:$0]  %s0, 64, %s18, [#allocation3]
    $region5: #{tpu_custom_call.1} parent=1 // pred_fallthru
      _
    // Predicated region
    $region6: #{tpu_custom_call.1} parent=1 // pred_check
      _
    $region7: #{tpu_custom_call.1} parent=1 // pred_check_branch
      %22 = sbr.rel (0) target = $region9
    $region8: #{tpu_custom_call.1} parent=1 // pred_region
      %s24 = ssub.s32 1024, 1024
      %25 = vsyncadd [#allocation6], %s24
      %s26 = sshll.u32 [#allocation5], 4
      %s27 = int_to_ptr.vmem [resolvable:$true] %s26
      %32 = dma.hbm_to_vmem [thread:$0]  %s1, 1024, %s27, [#allocation6], 64, 64, 4
    $region9: #{tpu_custom_call.1} parent=1 // pred_fallthru
      _
    // Predicated region
    $region10: #{tpu_custom_call.1} parent=1 // pred_check
      _
    $region11: #{tpu_custom_call.1} parent=1 // pred_check_branch
      %34 = sbr.rel (0) target = $region13
    $region12: #{tpu_custom_call.1} parent=1 // pred_region
      _
    $region13: #{tpu_custom_call.1} parent=1 // pred_fallthru
      _
    // Predicated region
    $region14: #{tpu_custom_call.1} parent=1 // pred_check
      _
    $region15: #{tpu_custom_call.1} parent=1 // pred_check_branch
      %36 = sbr.rel (0) target = $region17
    $region16: #{tpu_custom_call.1} parent=1 // pred_region
      %37 = dma.done [#allocation3], 64
    $region17: #{tpu_custom_call.1} parent=1 // pred_fallthru
      _
    // Predicated region
    $region18: #{tpu_custom_call.1} parent=1 // pred_check
      _
    $region19: #{tpu_custom_call.1} parent=1 // pred_check_branch
      %39 = sbr.rel (0) target = $region21
    $region20: #{tpu_custom_call.1} parent=1 // pred_region
      %40 = dma.done [#allocation6], 1024
    $region21: #{tpu_custom_call.1} parent=1 // pred_fallthru
      _
    %v42 = vld [vmem:[#allocation2] sm:$0xf]
    %v43 = vld [vmem:[#allocation5] sm:$0xf]
    %v44 = vld [vmem:[#allocation5 + $0x4] sm:$0xf]
    %v45 = vld [vmem:[#allocation5 + $0x8] sm:$0xf]
    %v46 = vld [vmem:[#allocation5 + $0xc] sm:$0xf]
    %v47 = vld [vmem:[#allocation5 + $0x10] sm:$0xf]
    %v48 = vld [vmem:[#allocation5 + $0x14] sm:$0xf]
    %v49 = vld [vmem:[#allocation5 + $0x18] sm:$0xf]
    %v50 = vld [vmem:[#allocation5 + $0x1c] sm:$0xf]
    %v51 = vld [vmem:[#allocation5 + $0x20] sm:$0xf]
    %v52 = vld [vmem:[#allocation5 + $0x24] sm:$0xf]
    %v53 = vld [vmem:[#allocation5 + $0x28] sm:$0xf]
    %v54 = vld [vmem:[#allocation5 + $0x2c] sm:$0xf]
    %v55 = vld [vmem:[#allocation5 + $0x30] sm:$0xf]
    %v56 = vld [vmem:[#allocation5 + $0x34] sm:$0xf]
    %v57 = vld [vmem:[#allocation5 + $0x38] sm:$0xf]
    %v58 = vld [vmem:[#allocation5 + $0x3c] sm:$0xf]
    %v75 = vunpack.c.l.b16 %v43
    %v76 = vunpack.c.l.b16 %v44
    %v77 = vunpack.c.l.b16 %v45
    %v78 = vunpack.c.l.b16 %v46
    %v79 = vunpack.c.l.b16 %v47
    %v80 = vunpack.c.l.b16 %v48
    %v81 = vunpack.c.l.b16 %v49
    %v82 = vunpack.c.l.b16 %v50
    %v83 = vunpack.c.l.b16 %v51
    %v84 = vunpack.c.l.b16 %v52
    %v85 = vunpack.c.l.b16 %v53
    %v86 = vunpack.c.l.b16 %v54
    %v87 = vunpack.c.l.b16 %v55
    %v88 = vunpack.c.l.b16 %v56
    %v89 = vunpack.c.l.b16 %v57
    %v90 = vunpack.c.l.b16 %v58
    %v91 = vpack.c.b16 %v76, %v75
    %v92 = vpack.c.b16 %v78, %v77
    %v93 = vpack.c.b16 %v80, %v79
    %v94 = vpack.c.b16 %v82, %v81
    %v95 = vpack.c.b16 %v84, %v83
    %v96 = vpack.c.b16 %v86, %v85
    %v97 = vpack.c.b16 %v88, %v87
    %v98 = vpack.c.b16 %v90, %v89
    %107 = vmatprep.subr.bf16.mxu0 0
    %108 = vmatpush1.bf16.msra.mxu0 %v98
    %109 = vmatprep.subr.bf16.mxu0 0
    %110 = vmatpush1.bf16.msra.mxu0 %v97
    %111 = vmatprep.subr.bf16.mxu0 0
    %112 = vmatpush1.bf16.msra.mxu0 %v96
    %113 = vmatprep.subr.bf16.mxu0 0
    %114 = vmatpush1.bf16.msra.mxu0 %v95
    %115 = vmatprep.subr.bf16.mxu0 0
    %116 = vmatpush1.bf16.msra.mxu0 %v94
    %117 = vmatprep.subr.bf16.mxu0 0
    %118 = vmatpush1.bf16.msra.mxu0 %v93
    %119 = vmatprep.subr.bf16.mxu0 0
    %120 = vmatpush1.bf16.msra.mxu0 %v92
    %121 = vmatprep.subr.bf16.mxu0 0
    %122 = vmatpush1.bf16.msra.mxu0 %v91
    %123 = vmatprep.subr.bf16.mxu0 0
    %124 = vmatpush2.bf16.msra.mxu0 0
    %125 = vmatprep.subr.bf16.mxu0 0
    %126 = vmatpush2.bf16.msra.mxu0 0
    %127 = vmatprep.subr.bf16.mxu0 0
    %128 = vmatpush2.bf16.msra.mxu0 0
    %129 = vmatprep.subr.bf16.mxu0 0
    %130 = vmatpush2.bf16.msra.mxu0 0
    %131 = vmatprep.subr.bf16.mxu0 0
    %132 = vmatpush2.bf16.msra.mxu0 0
    %133 = vmatprep.subr.bf16.mxu0 0
    %134 = vmatpush2.bf16.msra.mxu0 0
    %135 = vmatprep.subr.bf16.mxu0 0
    %136 = vmatpush2.bf16.msra.mxu0 0
    %137 = vmatprep.subr.bf16.mxu0 0
    %138 = vmatpush2.bf16.msra.mxu0 0
    %139 = vmatprep.mubr.bf16.mxu0 0
    %140 = vmatmul.mubr.bf16.gmra.mxu0 %v42
    %v141 = vpop.f32.mrf.mxu0
    %v142 = vadd.f32 0.0, %v141
    %v143 = vpop.f32.mrf.mxu0
    %v144 = vpop.f32.mrf.mxu0
    %v145 = vpop.f32.mrf.mxu0
    %146 = vdwg.mxu0
    %v147 = vmul.f32 %v142, 0.25
    %v148 = vld [vmem:[%s2] sm:$0x1]
    %v150 = vlaneseq
    %v151 = vshrl.u32 %v150, 7
    %v152 = vsub.s32 0, %v151
    %v153 = vrot.slane %v148, %v152
    %v155 = vadd.f32 %v147, %v153
    %156 = vst [vmem:[#allocation7] sm:$0xff] %v155
    // Predicated region
    $region22: #{tpu_custom_call.1} parent=1 // pred_check
      _
    $region23: #{tpu_custom_call.1} parent=1 // pred_check_branch
      %158 = sbr.rel (0) target = $region25
    $region24: #{tpu_custom_call.1} parent=1 // pred_region
      %s160 = ssub.s32 128, 128
      %161 = vsyncadd [#allocation4], %s160
      %s163 = sshll.u32 [#allocation7], 4
      %s164 = int_to_ptr.vmem [resolvable:$true] %s163
      %166 = dma.vmem_to_hbm [thread:$0]  %s164, 128, %s3, [#allocation4]
    $region25: #{tpu_custom_call.1} parent=1 // pred_fallthru
      _
    // Predicated region
    $region26: #{tpu_custom_call.1} parent=1 // pred_check
      _
    $region27: #{tpu_custom_call.1} parent=1 // pred_check_branch
      %168 = sbr.rel (0) target = $region29
    $region28: #{tpu_custom_call.1} parent=1 // pred_region
      %169 = dma.done [#allocation4], 128
    $region29: #{tpu_custom_call.1} parent=1 // pred_fallthru
      _
    %170 = vsyncpa [#allocation3], 1
    %171 = vsyncpa [#allocation6], 1
    %172 = vsyncpa [#allocation4], 1

</llo_original>
